<compile_context>
chip_gen: v6e
topology: v6e:2x2x1
jax: 0.10.0
libtpu: 0.0.40
codegen_flags: <defaults>
</compile_context>

<pallas_src>
import math
import jax
import jax.numpy as jnp
from jax import lax
from jax.experimental import pallas as pl
from jax.experimental.pallas import tpu as pltpu

LN_EPS = 1e-5


def _round_up(x, m):
    return ((x + m - 1) // m) * m


def _cdiv(a, b):
    return (a + b - 1) // b


def _gelu_exact(x):
    # PyTorch nn.GELU() default: exact erf-based formulation.
    return 0.5 * x * (1.0 + lax.erf(x / jnp.sqrt(jnp.float32(2.0))))


def _layernorm_fm(x, gamma, beta):
    # Feature-major LayerNorm: normalize over axis 0 (features on sublanes).
    mean = jnp.mean(x, axis=0, keepdims=True)
    centered = x - mean
    var = jnp.mean(centered * centered, axis=0, keepdims=True)
    inv = lax.rsqrt(var + LN_EPS)
    return centered * inv * gamma + beta


def actor_kernel(
    x_ref,
    w1_ref, b1_ref, g1_ref, be1_ref,
    w2_ref, b2_ref, g2_ref, be2_ref,
    w3_ref, b3_ref,
    o_ref,
):
    # Everything feature-major: features on sublanes, batch on lanes.
    x = x_ref[...]                                                   # [obs_dim, tile_b]

    # Linear 1 + LayerNorm + GELU
    h = jnp.dot(w1_ref[...], x, preferred_element_type=jnp.float32) + b1_ref[...]
    h = _layernorm_fm(h, g1_ref[...], be1_ref[...])
    h = _gelu_exact(h)

    # Linear 2 + LayerNorm + GELU
    h = jnp.dot(w2_ref[...], h, preferred_element_type=jnp.float32) + b2_ref[...]
    h = _layernorm_fm(h, g2_ref[...], be2_ref[...])
    h = _gelu_exact(h)

    # Output head: [act_pad(=8), tile_b] — unmasked lane-dense stores.
    o_ref[...] = (
        jnp.dot(w3_ref[...], h, preferred_element_type=jnp.float32) + b3_ref[...]
    ).astype(o_ref.dtype)


def actor_forward(obs, params, max_tile_b=4096):
    """obs: [B, obs_dim] float32 -> logits [B, action_dim] float32."""
    B, obs_dim = obs.shape
    hidden = params["w1"].shape[1]
    act_dim = params["w3"].shape[1]

    # ---- Feature-major parameters (one-time transposes / reshapes). ----
    act_pad = _round_up(max(act_dim, 1), 8)          # 8-sublane output head
    w1t = params["w1"].T                             # [hidden, obs_dim]
    w2t = params["w2"].T                             # [hidden, hidden]
    w3t = jnp.zeros((act_pad, hidden), jnp.float32).at[:act_dim, :].set(params["w3"].T)
    b1c = params["b1"].reshape(hidden, 1)
    g1c = params["g1"].reshape(hidden, 1)
    be1c = params["be1"].reshape(hidden, 1)
    b2c = params["b2"].reshape(hidden, 1)
    g2c = params["g2"].reshape(hidden, 1)
    be2c = params["be2"].reshape(hidden, 1)
    b3c = jnp.zeros((act_pad, 1), jnp.float32).at[:act_dim, :].set(
        params["b3"].reshape(act_dim, 1)
    )

    # ---- Adaptive batch tiling on the lane axis (multiple of 128). ----
    n_tiles = max(1, _cdiv(B, max_tile_b))
    if n_tiles == 1 and B >= 256:
        n_tiles = 2          # >=2 grid steps so v7x can shard across both TCs
    tile_b = _round_up(_cdiv(B, n_tiles), 128)
    b_pad = n_tiles * tile_b

    xt = obs.T                                       # [obs_dim, B] feature-major
    if b_pad != B:
        xt = jnp.pad(xt, ((0, 0), (0, b_pad - B)))   # padded cols: finite garbage, sliced off

    args = (xt, w1t, b1c, g1c, be1c, w2t, b2c, g2c, be2c, w3t, b3c)

    # Activations move per grid step; parameters are VMEM-resident (constant map).
    x_spec = pl.BlockSpec((obs_dim, tile_b), lambda i: (0, i))
    resident = lambda a: pl.BlockSpec(a.shape, lambda i: (0, 0))
    in_specs = [x_spec] + [resident(a) for a in args[1:]]
    out_spec = pl.BlockSpec((act_pad, tile_b), lambda i: (0, i))

    # Advisory cost estimate for XLA's scheduler.
    param_bytes = sum(int(a.size) * 4 for a in args[1:])
    flops = 2 * b_pad * (obs_dim * hidden + hidden * hidden + hidden * act_pad)
    transcendentals = b_pad * (2 * hidden + 2)       # erf x2 layers + rsqrt x2
    bytes_accessed = b_pad * (obs_dim + act_pad) * 4 + param_bytes

    out = pl.pallas_call(
        actor_kernel,
        out_shape=jax.ShapeDtypeStruct((act_pad, b_pad), jnp.float32),
        grid=(n_tiles,),
        in_specs=in_specs,
        out_specs=out_spec,
        compiler_params=pltpu.CompilerParams(
            dimension_semantics=("parallel",),
        ),
        cost_estimate=pl.CostEstimate(
            flops=flops,
            transcendentals=transcendentals,
            bytes_accessed=bytes_accessed,
        ),
    )(*args)

    # [act_pad, b_pad] -> [B, act_dim]; transposing a [6, B] slab is cheap.
    return out[:act_dim, :B].T


def init_params(key, obs_dim, hidden, act_dim):
    """Deterministic init mimicking PyTorch Linear default (uniform +/- 1/sqrt(fan_in))."""
    ks = jax.random.split(key, 6)

    def linear(kw, kb, fan_in, fan_out):
        bound = 1.0 / math.sqrt(fan_in)
        w = jax.random.uniform(kw, (fan_in, fan_out), jnp.float32, -bound, bound)
        b = jax.random.uniform(kb, (1, fan_out), jnp.float32, -bound, bound)
        return w, b

    w1, b1 = linear(ks[0], ks[1], obs_dim, hidden)
    w2, b2 = linear(ks[2], ks[3], hidden, hidden)
    w3, b3 = linear(ks[4], ks[5], hidden, act_dim)
    return {
        "w1": w1, "b1": b1,
        "g1": jnp.ones((1, hidden), jnp.float32), "be1": jnp.zeros((1, hidden), jnp.float32),
        "w2": w2, "b2": b2,
        "g2": jnp.ones((1, hidden), jnp.float32), "be2": jnp.zeros((1, hidden), jnp.float32),
        "w3": w3, "b3": b3,
    }


def _layernorm_ref(x, gamma, beta):
    mean = jnp.mean(x, axis=-1, keepdims=True)
    centered = x - mean
    var = jnp.mean(centered * centered, axis=-1, keepdims=True)
    inv = lax.rsqrt(var + LN_EPS)
    return centered * inv * gamma + beta


def actor_forward_ref(obs, p):
    """Pure-JAX reference (batch-major, like PyTorch) for correctness check."""
    h = obs @ p["w1"] + p["b1"]
    h = _layernorm_ref(h, p["g1"], p["be1"])
    h = _gelu_exact(h)
    h = h @ p["w2"] + p["b2"]
    h = _layernorm_ref(h, p["g2"], p["be2"])
    h = _gelu_exact(h)
    return h @ p["w3"] + p["b3"]


if __name__ == "__main__":
    OBS_DIM, HIDDEN, ACT_DIM = 16, 64, 6

    key = jax.random.PRNGKey(0)
    k_obs, k_obs2, k_obs3, k_params = jax.random.split(key, 4)
    params = init_params(k_params, OBS_DIM, HIDDEN, ACT_DIM)

    # Small per-step inference batch (single 128-lane tile).
    B = 8
    obs = jax.random.normal(k_obs, (B, OBS_DIM), dtype=jnp.float32)
    logits = actor_forward(obs, params)
    jax.block_until_ready(logits)
    ref = actor_forward_ref(obs, params)
    assert logits.shape == (B, ACT_DIM)
    assert jnp.allclose(logits, ref, atol=1e-4, rtol=1e-4)

    # Medium batch: exercises lane padding (200 -> 256), single grid step.
    B2 = 200
    obs2 = jax.random.normal(k_obs2, (B2, OBS_DIM), dtype=jnp.float32)
    logits2 = actor_forward(obs2, params)
    jax.block_until_ready(logits2)
    ref2 = actor_forward_ref(obs2, params)
    assert logits2.shape == (B2, ACT_DIM)
    assert jnp.allclose(logits2, ref2, atol=1e-4, rtol=1e-4)

    # Rollout-style batch: exercises the >=2-grid-step (dual-TC) path + padding
    # (600 -> 2 tiles of 384 lanes = 768 padded columns).
    B3 = 600
    obs3 = jax.random.normal(k_obs3, (B3, OBS_DIM), dtype=jnp.float32)
    logits3 = actor_forward(obs3, params)
    jax.block_until_ready(logits3)
    ref3 = actor_forward_ref(obs3, params)
    assert logits3.shape == (B3, ACT_DIM)
    assert jnp.allclose(logits3, ref3, atol=1e-4, rtol=1e-4)

    print("KERNEL_OK")
</pallas_src>

<mosaic_0001>
module attributes {stable_mosaic.version = 11 : i64} {
  func.func @actor_kernel(%arg0: i32, %arg1: memref<16x128xf32, #tpu.memory_space<vmem>>, %arg2: memref<64x16xf32, #tpu.memory_space<vmem>>, %arg3: memref<64x1xf32, #tpu.memory_space<vmem>>, %arg4: memref<64x1xf32, #tpu.memory_space<vmem>>, %arg5: memref<64x1xf32, #tpu.memory_space<vmem>>, %arg6: memref<64x64xf32, #tpu.memory_space<vmem>>, %arg7: memref<64x1xf32, #tpu.memory_space<vmem>>, %arg8: memref<64x1xf32, #tpu.memory_space<vmem>>, %arg9: memref<64x1xf32, #tpu.memory_space<vmem>>, %arg10: memref<8x64xf32, #tpu.memory_space<vmem>>, %arg11: memref<8x1xf32, #tpu.memory_space<vmem>>, %arg12: memref<8x128xf32, #tpu.memory_space<vmem>>) attributes {dimension_semantics = [#tpu.dimension_semantics<parallel>], iteration_bounds = array<i64: 1>, scalar_prefetch = 0 : i64, scratch_operands = 0 : i64, tpu.core_type = #tpu.core_type<tc>, window_params = [{transform_indices = @transform_0, window_bounds = array<i64: 16, 128>}, {pipeline_mode = #tpu.pipeline_mode<synchronous>, transform_indices = @transform_1, window_bounds = array<i64: 64, 16>}, {pipeline_mode = #tpu.pipeline_mode<synchronous>, transform_indices = @transform_2, window_bounds = array<i64: 64, 1>}, {pipeline_mode = #tpu.pipeline_mode<synchronous>, transform_indices = @transform_3, window_bounds = array<i64: 64, 1>}, {pipeline_mode = #tpu.pipeline_mode<synchronous>, transform_indices = @transform_4, window_bounds = array<i64: 64, 1>}, {pipeline_mode = #tpu.pipeline_mode<synchronous>, transform_indices = @transform_5, window_bounds = array<i64: 64, 64>}, {pipeline_mode = #tpu.pipeline_mode<synchronous>, transform_indices = @transform_6, window_bounds = array<i64: 64, 1>}, {pipeline_mode = #tpu.pipeline_mode<synchronous>, transform_indices = @transform_7, window_bounds = array<i64: 64, 1>}, {pipeline_mode = #tpu.pipeline_mode<synchronous>, transform_indices = @transform_8, window_bounds = array<i64: 64, 1>}, {pipeline_mode = #tpu.pipeline_mode<synchronous>, transform_indices = @transform_9, window_bounds = array<i64: 8, 64>}, {pipeline_mode = #tpu.pipeline_mode<synchronous>, transform_indices = @transform_10, window_bounds = array<i64: 8, 1>}, {transform_indices = @transform_11, window_bounds = array<i64: 8, 128>}]} {
    %c0 = arith.constant 0 : index
    %c0_0 = arith.constant 0 : index
    %0 = vector.load %arg1[%c0, %c0_0] : memref<16x128xf32, #tpu.memory_space<vmem>>, vector<16x128xf32>
    %c0_1 = arith.constant 0 : index
    %c0_2 = arith.constant 0 : index
    %1 = vector.load %arg2[%c0_1, %c0_2] : memref<64x16xf32, #tpu.memory_space<vmem>>, vector<64x16xf32>
    %cst = arith.constant dense<0.000000e+00> : vector<64x128xf32>
    %2 = tpu.matmul %1, %0, %cst {dimension_numbers = #tpu.dot_dimension_numbers<[1], [0], [0], [1], [0, 0, 1, 1], [], []>} : vector<64x16xf32>, vector<16x128xf32>, vector<64x128xf32> -> vector<64x128xf32>
    %c0_3 = arith.constant 0 : index
    %c0_4 = arith.constant 0 : index
    %3 = vector.load %arg3[%c0_3, %c0_4] : memref<64x1xf32, #tpu.memory_space<vmem>>, vector<64x1xf32>
    %4 = vector.broadcast %3 : vector<64x1xf32> to vector<64x128xf32>
    %5 = arith.addf %2, %4 : vector<64x128xf32>
    %c0_5 = arith.constant 0 : index
    %c0_6 = arith.constant 0 : index
    %6 = vector.load %arg4[%c0_5, %c0_6] : memref<64x1xf32, #tpu.memory_space<vmem>>, vector<64x1xf32>
    %c0_7 = arith.constant 0 : index
    %c0_8 = arith.constant 0 : index
    %7 = vector.load %arg5[%c0_7, %c0_8] : memref<64x1xf32, #tpu.memory_space<vmem>>, vector<64x1xf32>
    %cst_9 = arith.constant dense<0.000000e+00> : vector<128xf32>
    %8 = vector.multi_reduction <add>, %5, %cst_9 [0] : vector<64x128xf32> to vector<128xf32>
    %9 = vector.shape_cast %8 : vector<128xf32> to vector<1x128xf32>
    %cst_10 = arith.constant 6.400000e+01 : f32
    %10 = vector.broadcast %cst_10 : f32 to vector<1x128xf32>
    %11 = arith.divf %9, %10 : vector<1x128xf32>
    %12 = vector.broadcast %11 : vector<1x128xf32> to vector<64x128xf32>
    %13 = arith.subf %5, %12 : vector<64x128xf32>
    %14 = arith.mulf %13, %13 : vector<64x128xf32>
    %cst_11 = arith.constant dense<0.000000e+00> : vector<128xf32>
    %15 = vector.multi_reduction <add>, %14, %cst_11 [0] : vector<64x128xf32> to vector<128xf32>
    %16 = vector.shape_cast %15 : vector<128xf32> to vector<1x128xf32>
    %cst_12 = arith.constant 6.400000e+01 : f32
    %17 = vector.broadcast %cst_12 : f32 to vector<1x128xf32>
    %18 = arith.divf %16, %17 : vector<1x128xf32>
    %cst_13 = arith.constant 9.99999974E-6 : f32
    %19 = vector.broadcast %cst_13 : f32 to vector<1x128xf32>
    %20 = arith.addf %18, %19 : vector<1x128xf32>
    %21 = math.rsqrt %20 : vector<1x128xf32>
    %22 = vector.broadcast %21 : vector<1x128xf32> to vector<64x128xf32>
    %23 = arith.mulf %13, %22 : vector<64x128xf32>
    %24 = vector.broadcast %6 : vector<64x1xf32> to vector<64x128xf32>
    %25 = arith.mulf %23, %24 : vector<64x128xf32>
    %26 = vector.broadcast %7 : vector<64x1xf32> to vector<64x128xf32>
    %27 = arith.addf %25, %26 : vector<64x128xf32>
    %cst_14 = arith.constant 5.000000e-01 : f32
    %28 = vector.broadcast %cst_14 : f32 to vector<64x128xf32>
    %29 = arith.mulf %28, %27 : vector<64x128xf32>
    %cst_15 = arith.constant 2.000000e+00 : f32
    %30 = math.sqrt %cst_15 : f32
    %31 = vector.broadcast %30 : f32 to vector<64x128xf32>
    %32 = arith.divf %27, %31 : vector<64x128xf32>
    %33 = math.erf %32 : vector<64x128xf32>
    %cst_16 = arith.constant 1.000000e+00 : f32
    %34 = vector.broadcast %cst_16 : f32 to vector<64x128xf32>
    %35 = arith.addf %34, %33 : vector<64x128xf32>
    %36 = arith.mulf %29, %35 : vector<64x128xf32>
    %c0_17 = arith.constant 0 : index
    %c0_18 = arith.constant 0 : index
    %37 = vector.load %arg6[%c0_17, %c0_18] : memref<64x64xf32, #tpu.memory_space<vmem>>, vector<64x64xf32>
    %cst_19 = arith.constant dense<0.000000e+00> : vector<64x128xf32>
    %38 = tpu.matmul %37, %36, %cst_19 {dimension_numbers = #tpu.dot_dimension_numbers<[1], [0], [0], [1], [0, 0, 1, 1], [], []>} : vector<64x64xf32>, vector<64x128xf32>, vector<64x128xf32> -> vector<64x128xf32>
    %c0_20 = arith.constant 0 : index
    %c0_21 = arith.constant 0 : index
    %39 = vector.load %arg7[%c0_20, %c0_21] : memref<64x1xf32, #tpu.memory_space<vmem>>, vector<64x1xf32>
    %40 = vector.broadcast %39 : vector<64x1xf32> to vector<64x128xf32>
    %41 = arith.addf %38, %40 : vector<64x128xf32>
    %c0_22 = arith.constant 0 : index
    %c0_23 = arith.constant 0 : index
    %42 = vector.load %arg8[%c0_22, %c0_23] : memref<64x1xf32, #tpu.memory_space<vmem>>, vector<64x1xf32>
    %c0_24 = arith.constant 0 : index
    %c0_25 = arith.constant 0 : index
    %43 = vector.load %arg9[%c0_24, %c0_25] : memref<64x1xf32, #tpu.memory_space<vmem>>, vector<64x1xf32>
    %cst_26 = arith.constant dense<0.000000e+00> : vector<128xf32>
    %44 = vector.multi_reduction <add>, %41, %cst_26 [0] : vector<64x128xf32> to vector<128xf32>
    %45 = vector.shape_cast %44 : vector<128xf32> to vector<1x128xf32>
    %cst_27 = arith.constant 6.400000e+01 : f32
    %46 = vector.broadcast %cst_27 : f32 to vector<1x128xf32>
    %47 = arith.divf %45, %46 : vector<1x128xf32>
    %48 = vector.broadcast %47 : vector<1x128xf32> to vector<64x128xf32>
    %49 = arith.subf %41, %48 : vector<64x128xf32>
    %50 = arith.mulf %49, %49 : vector<64x128xf32>
    %cst_28 = arith.constant dense<0.000000e+00> : vector<128xf32>
    %51 = vector.multi_reduction <add>, %50, %cst_28 [0] : vector<64x128xf32> to vector<128xf32>
    %52 = vector.shape_cast %51 : vector<128xf32> to vector<1x128xf32>
    %cst_29 = arith.constant 6.400000e+01 : f32
    %53 = vector.broadcast %cst_29 : f32 to vector<1x128xf32>
    %54 = arith.divf %52, %53 : vector<1x128xf32>
    %cst_30 = arith.constant 9.99999974E-6 : f32
    %55 = vector.broadcast %cst_30 : f32 to vector<1x128xf32>
    %56 = arith.addf %54, %55 : vector<1x128xf32>
    %57 = math.rsqrt %56 : vector<1x128xf32>
    %58 = vector.broadcast %57 : vector<1x128xf32> to vector<64x128xf32>
    %59 = arith.mulf %49, %58 : vector<64x128xf32>
    %60 = vector.broadcast %42 : vector<64x1xf32> to vector<64x128xf32>
    %61 = arith.mulf %59, %60 : vector<64x128xf32>
    %62 = vector.broadcast %43 : vector<64x1xf32> to vector<64x128xf32>
    %63 = arith.addf %61, %62 : vector<64x128xf32>
    %cst_31 = arith.constant 5.000000e-01 : f32
    %64 = vector.broadcast %cst_31 : f32 to vector<64x128xf32>
    %65 = arith.mulf %64, %63 : vector<64x128xf32>
    %cst_32 = arith.constant 2.000000e+00 : f32
    %66 = math.sqrt %cst_32 : f32
    %67 = vector.broadcast %66 : f32 to vector<64x128xf32>
    %68 = arith.divf %63, %67 : vector<64x128xf32>
    %69 = math.erf %68 : vector<64x128xf32>
    %cst_33 = arith.constant 1.000000e+00 : f32
    %70 = vector.broadcast %cst_33 : f32 to vector<64x128xf32>
    %71 = arith.addf %70, %69 : vector<64x128xf32>
    %72 = arith.mulf %65, %71 : vector<64x128xf32>
    %c0_34 = arith.constant 0 : index
    %c0_35 = arith.constant 0 : index
    %73 = vector.load %arg10[%c0_34, %c0_35] : memref<8x64xf32, #tpu.memory_space<vmem>>, vector<8x64xf32>
    %cst_36 = arith.constant dense<0.000000e+00> : vector<8x128xf32>
    %74 = tpu.matmul %73, %72, %cst_36 {dimension_numbers = #tpu.dot_dimension_numbers<[1], [0], [0], [1], [0, 0, 1, 1], [], []>} : vector<8x64xf32>, vector<64x128xf32>, vector<8x128xf32> -> vector<8x128xf32>
    %c0_37 = arith.constant 0 : index
    %c0_38 = arith.constant 0 : index
    %75 = vector.load %arg11[%c0_37, %c0_38] : memref<8x1xf32, #tpu.memory_space<vmem>>, vector<8x1xf32>
    %76 = vector.broadcast %75 : vector<8x1xf32> to vector<8x128xf32>
    %77 = arith.addf %74, %76 : vector<8x128xf32>
    %c0_39 = arith.constant 0 : index
    %c0_40 = arith.constant 0 : index
    %78 = vector.load %arg12[%c0_39, %c0_40] : memref<8x128xf32, #tpu.memory_space<vmem>>, vector<8x128xf32>
    tpu.vector_store %arg12[%c0_39, %c0_40], %77 {strides = array<i32>} : memref<8x128xf32, #tpu.memory_space<vmem>>, vector<8x128xf32>,
    return
  }
  func.func @transform_0(%arg0: i32) -> (i32, i32) {
    %c0_i32 = arith.constant 0 : i32
    %c0_i32_0 = arith.constant 0 : i32
    return %c0_i32, %arg0 : i32, i32
  }
  func.func @transform_1(%arg0: i32) -> (i32, i32) {
    %c0_i32 = arith.constant 0 : i32
    %c0_i32_0 = arith.constant 0 : i32
    %c0_i32_1 = arith.constant 0 : i32
    return %c0_i32, %c0_i32_0 : i32, i32
  }
  func.func @transform_2(%arg0: i32) -> (i32, i32) {
    %c0_i32 = arith.constant 0 : i32
    %c0_i32_0 = arith.constant 0 : i32
    %c0_i32_1 = arith.constant 0 : i32
    return %c0_i32, %c0_i32_0 : i32, i32
  }
  func.func @transform_3(%arg0: i32) -> (i32, i32) {
    %c0_i32 = arith.constant 0 : i32
    %c0_i32_0 = arith.constant 0 : i32
    %c0_i32_1 = arith.constant 0 : i32
    return %c0_i32, %c0_i32_0 : i32, i32
  }
  func.func @transform_4(%arg0: i32) -> (i32, i32) {
    %c0_i32 = arith.constant 0 : i32
    %c0_i32_0 = arith.constant 0 : i32
    %c0_i32_1 = arith.constant 0 : i32
    return %c0_i32, %c0_i32_0 : i32, i32
  }
  func.func @transform_5(%arg0: i32) -> (i32, i32) {
    %c0_i32 = arith.constant 0 : i32
    %c0_i32_0 = arith.constant 0 : i32
    %c0_i32_1 = arith.constant 0 : i32
    return %c0_i32, %c0_i32_0 : i32, i32
  }
  func.func @transform_6(%arg0: i32) -> (i32, i32) {
    %c0_i32 = arith.constant 0 : i32
    %c0_i32_0 = arith.constant 0 : i32
    %c0_i32_1 = arith.constant 0 : i32
    return %c0_i32, %c0_i32_0 : i32, i32
  }
  func.func @transform_7(%arg0: i32) -> (i32, i32) {
    %c0_i32 = arith.constant 0 : i32
    %c0_i32_0 = arith.constant 0 : i32
    %c0_i32_1 = arith.constant 0 : i32
    return %c0_i32, %c0_i32_0 : i32, i32
  }
  func.func @transform_8(%arg0: i32) -> (i32, i32) {
    %c0_i32 = arith.constant 0 : i32
    %c0_i32_0 = arith.constant 0 : i32
    %c0_i32_1 = arith.constant 0 : i32
    return %c0_i32, %c0_i32_0 : i32, i32
  }
  func.func @transform_9(%arg0: i32) -> (i32, i32) {
    %c0_i32 = arith.constant 0 : i32
    %c0_i32_0 = arith.constant 0 : i32
    %c0_i32_1 = arith.constant 0 : i32
    return %c0_i32, %c0_i32_0 : i32, i32
  }
  func.func @transform_10(%arg0: i32) -> (i32, i32) {
    %c0_i32 = arith.constant 0 : i32
    %c0_i32_0 = arith.constant 0 : i32
    %c0_i32_1 = arith.constant 0 : i32
    return %c0_i32, %c0_i32_0 : i32, i32
  }
  func.func @transform_11(%arg0: i32) -> (i32, i32) {
    %c0_i32 = arith.constant 0 : i32
    %c0_i32_0 = arith.constant 0 : i32
    return %c0_i32, %arg0 : i32, i32
  }
}

</mosaic_0001>

<llo_original>
// kernel: tpu_custom_call.1
$region0: #{tpu_custom_call.1}
  #allocation0 [shape = 'u32[]', space=smem, size = 0x4, offset = 0x4, fixed_abs, tag = 'smem constant byte address 0x4 - core index']
  #allocation1 [shape = 'u32[144,128]{1,0:T(1,128)}', space=vmem, size = 0x12000, scoped, tag = 'internal scratch']
  %s0 = inlined_call_operand.vmem [shape: f32[16,128], index: 0, kind: input, shape index: {}]
  %s1 = inlined_call_operand.vmem [shape: f32[64,16], index: 1, kind: input, shape index: {}]
  %s2 = inlined_call_operand.vmem [shape: f32[64,1], index: 2, kind: input, shape index: {}]
  %s3 = inlined_call_operand.vmem [shape: f32[64,1], index: 3, kind: input, shape index: {}]
  %s4 = inlined_call_operand.vmem [shape: f32[64,1], index: 4, kind: input, shape index: {}]
  %s5 = inlined_call_operand.vmem [shape: f32[64,64], index: 5, kind: input, shape index: {}]
  %s6 = inlined_call_operand.vmem [shape: f32[64,1], index: 6, kind: input, shape index: {}]
  %s7 = inlined_call_operand.vmem [shape: f32[64,1], index: 7, kind: input, shape index: {}]
  %s8 = inlined_call_operand.vmem [shape: f32[64,1], index: 8, kind: input, shape index: {}]
  %s9 = inlined_call_operand.vmem [shape: f32[8,64], index: 9, kind: input, shape index: {}]
  %s10 = inlined_call_operand.vmem [shape: f32[8,1], index: 10, kind: input, shape index: {}]
  %s11 = inlined_call_operand.hbm [shape: f32[8,128], index: 11, kind: output, shape index: {}]
  %s12 = sld [smem:[#allocation0]]
  $region54: #{tpu_custom_call.1} parent=0
    _
  %s14 = ssub.s32 1, %s12
  %s15 = scalar_select 0, %s14, %s12
  $region1: #{tpu_custom_call.1} parent=0
    #allocation2 [shape = 'u8[4096]{0}', space=vmem, size = 0x1000, scoped, tag = 'output window, operand 0, single buffered']
    #allocation3 [shape = 's32[1]{0}', space=sflag, size = 0x4, scoped, tag = 'scoped memory for tpu_custom_call.1']
    %16 = vsyncpa [#allocation3], 0
    // Predicated region
    $region2: #{tpu_custom_call.1} parent=1 // pred_check
      _
    $region3: #{tpu_custom_call.1} parent=1 // pred_check_branch
      %18 = sbr.rel (0) target = $region5
    $region4: #{tpu_custom_call.1} parent=1 // pred_region
      _
    $region5: #{tpu_custom_call.1} parent=1 // pred_fallthru
      _
    // Predicated region
    $region6: #{tpu_custom_call.1} parent=1 // pred_check
      _
    $region7: #{tpu_custom_call.1} parent=1 // pred_check_branch
      %20 = sbr.rel (0) target = $region9
    $region8: #{tpu_custom_call.1} parent=1 // pred_region
      _
    $region9: #{tpu_custom_call.1} parent=1 // pred_fallthru
      _
    // Predicated region
    $region10: #{tpu_custom_call.1} parent=1 // pred_check
      _
    $region11: #{tpu_custom_call.1} parent=1 // pred_check_branch
      %22 = sbr.rel (0) target = $region13
    $region12: #{tpu_custom_call.1} parent=1 // pred_region
      _
    $region13: #{tpu_custom_call.1} parent=1 // pred_fallthru
      _
    // Predicated region
    $region14: #{tpu_custom_call.1} parent=1 // pred_check
      _
    $region15: #{tpu_custom_call.1} parent=1 // pred_check_branch
      %24 = sbr.rel (0) target = $region17
    $region16: #{tpu_custom_call.1} parent=1 // pred_region
      _
    $region17: #{tpu_custom_call.1} parent=1 // pred_fallthru
      _
    // Predicated region
    $region18: #{tpu_custom_call.1} parent=1 // pred_check
      _
    $region19: #{tpu_custom_call.1} parent=1 // pred_check_branch
      %26 = sbr.rel (0) target = $region21
    $region20: #{tpu_custom_call.1} parent=1 // pred_region
      _
    $region21: #{tpu_custom_call.1} parent=1 // pred_fallthru
      _
    // Predicated region
    $region22: #{tpu_custom_call.1} parent=1 // pred_check
      _
    $region23: #{tpu_custom_call.1} parent=1 // pred_check_branch
      %28 = sbr.rel (0) target = $region25
    $region24: #{tpu_custom_call.1} parent=1 // pred_region
      _
    $region25: #{tpu_custom_call.1} parent=1 // pred_fallthru
      _
    // Predicated region
    $region26: #{tpu_custom_call.1} parent=1 // pred_check
      _
    $region27: #{tpu_custom_call.1} parent=1 // pred_check_branch
      %30 = sbr.rel (0) target = $region29
    $region28: #{tpu_custom_call.1} parent=1 // pred_region
      _
    $region29: #{tpu_custom_call.1} parent=1 // pred_fallthru
      _
    // Predicated region
    $region30: #{tpu_custom_call.1} parent=1 // pred_check
      _
    $region31: #{tpu_custom_call.1} parent=1 // pred_check_branch
      %32 = sbr.rel (0) target = $region33
    $region32: #{tpu_custom_call.1} parent=1 // pred_region
      _
    $region33: #{tpu_custom_call.1} parent=1 // pred_fallthru
      _
    // Predicated region
    $region34: #{tpu_custom_call.1} parent=1 // pred_check
      _
    $region35: #{tpu_custom_call.1} parent=1 // pred_check_branch
      %34 = sbr.rel (0) target = $region37
    $region36: #{tpu_custom_call.1} parent=1 // pred_region
      _
    $region37: #{tpu_custom_call.1} parent=1 // pred_fallthru
      _
    // Predicated region
    $region38: #{tpu_custom_call.1} parent=1 // pred_check
      _
    $region39: #{tpu_custom_call.1} parent=1 // pred_check_branch
      %36 = sbr.rel (0) target = $region41
    $region40: #{tpu_custom_call.1} parent=1 // pred_region
      _
    $region41: #{tpu_custom_call.1} parent=1 // pred_fallthru
      _
    // Predicated region
    $region42: #{tpu_custom_call.1} parent=1 // pred_check
      _
    $region43: #{tpu_custom_call.1} parent=1 // pred_check_branch
      %38 = sbr.rel (0) target = $region45
    $region44: #{tpu_custom_call.1} parent=1 // pred_region
      _
    $region45: #{tpu_custom_call.1} parent=1 // pred_fallthru
      _
    %v39 = vld [vmem:[%s0] sm:$0xff]
    %v40 = vld [vmem:[%s0 + $0x8] sm:$0xff]
    %v41 = vld [vmem:[%s1] sm:$0xff]
    %v42 = vld [vmem:[%s1 + $0x8] sm:$0xff]
    %v43 = vld [vmem:[%s1 + $0x10] sm:$0xff]
    %v44 = vld [vmem:[%s1 + $0x18] sm:$0xff]
    %v45 = vld [vmem:[%s1 + $0x20] sm:$0xff]
    %v46 = vld [vmem:[%s1 + $0x28] sm:$0xff]
    %v47 = vld [vmem:[%s1 + $0x30] sm:$0xff]
    %v48 = vld [vmem:[%s1 + $0x38] sm:$0xff]
    %v49 = vld [vmem:[%s2] sm:$0xff]
    %v50 = vld [vmem:[%s2 + $0x8] sm:$0xff]
    %v51 = vld [vmem:[%s2 + $0x10] sm:$0xff]
    %v52 = vld [vmem:[%s2 + $0x18] sm:$0xff]
    %v53 = vld [vmem:[%s2 + $0x20] sm:$0xff]
    %v54 = vld [vmem:[%s2 + $0x28] sm:$0xff]
    %v55 = vld [vmem:[%s2 + $0x30] sm:$0xff]
    %v56 = vld [vmem:[%s2 + $0x38] sm:$0xff]
    %58 = vset.pattern.permute.xlu0 0
    %59 = vperm.xlu0 %58, %v49
    %v60 = vpop.permute.xlu0 %59
    %63 = vset.pattern.permute.xlu0 0
    %64 = vperm.xlu0 %63, %v50
    %v65 = vpop.permute.xlu0 %64
    %68 = vset.pattern.permute.xlu0 0
    %69 = vperm.xlu0 %68, %v51
    %v70 = vpop.permute.xlu0 %69
    %73 = vset.pattern.permute.xlu0 0
    %74 = vperm.xlu0 %73, %v52
    %v75 = vpop.permute.xlu0 %74
    %78 = vset.pattern.permute.xlu0 0
    %79 = vperm.xlu0 %78, %v53
    %v80 = vpop.permute.xlu0 %79
    %83 = vset.pattern.permute.xlu0 0
    %84 = vperm.xlu0 %83, %v54
    %v85 = vpop.permute.xlu0 %84
    %88 = vset.pattern.permute.xlu0 0
    %89 = vperm.xlu0 %88, %v55
    %v90 = vpop.permute.xlu0 %89
    %93 = vset.pattern.permute.xlu0 0
    %94 = vperm.xlu0 %93, %v56
    %v95 = vpop.permute.xlu0 %94
    %vm97 = vcmask 130048
    %v99 = vsel %vm97, %v41, 0
    %v102 = vsel %vm97, %v42, 0
    %v105 = vsel %vm97, %v43, 0
    %v108 = vsel %vm97, %v44, 0
    %v111 = vsel %vm97, %v45, 0
    %v114 = vsel %vm97, %v46, 0
    %v117 = vsel %vm97, %v47, 0
    %v120 = vsel %vm97, %v48, 0
    %122 = vmatprep.subr.mxu0 0.0
    %123 = vmatpush1.msra.mxu0 0.0
    %124 = vmatprep.subr.mxu0 0.0
    %125 = vmatpush1.msra.mxu0 0.0
    %126 = vmatprep.subr.mxu0 0.0
    %127 = vmatpush1.msra.mxu0 0.0
    %128 = vmatprep.subr.mxu0 0.0
    %129 = vmatpush1.msra.mxu0 0.0
    %130 = vmatprep.subr.mxu0 0.0
    %131 = vmatpush1.msra.mxu0 0.0
    %132 = vmatprep.subr.mxu0 0.0
    %133 = vmatpush1.msra.mxu0 0.0
    %134 = vmatprep.subr.mxu0 0.0
    %135 = vmatpush1.msra.mxu0 0.0
    %136 = vmatprep.subr.mxu0 0.0
    %137 = vmatpush1.msra.mxu0 0.0
    %138 = vmatprep.subr.mxu0 0.0
    %139 = vmatpush1.msra.mxu0 0.0
    %140 = vmatprep.subr.mxu0 0.0
    %141 = vmatpush1.msra.mxu0 0.0
    %142 = vmatprep.subr.mxu0 0.0
    %143 = vmatpush1.msra.mxu0 0.0
    %144 = vmatprep.subr.mxu0 0.0
    %145 = vmatpush1.msra.mxu0 0.0
    %146 = vmatprep.subr.mxu0 0.0
    %147 = vmatpush1.msra.mxu0 0.0
    %148 = vmatprep.subr.mxu0 0.0
    %149 = vmatpush1.msra.mxu0 0.0
    %150 = vmatprep.subr.mxu0 0.0
    %151 = vmatpush1.msra.mxu0 %v40
    %152 = vmatprep.subr.mxu0 0.0
    %153 = vmatpush1.msra.mxu0 %v39
    %154 = vmatprep.subr.mxu0 0.0
    %155 = vmatpush2.msra.mxu0 0.0
    %156 = vmatprep.subr.mxu0 0.0
    %157 = vmatpush2.msra.mxu0 0.0
    %158 = vmatprep.subr.mxu0 0.0
    %159 = vmatpush2.msra.mxu0 0.0
    %160 = vmatprep.subr.mxu0 0.0
    %161 = vmatpush2.msra.mxu0 0.0
    %162 = vmatprep.subr.mxu0 0.0
    %163 = vmatpush2.msra.mxu0 0.0
    %164 = vmatprep.subr.mxu0 0.0
    %165 = vmatpush2.msra.mxu0 0.0
    %166 = vmatprep.subr.mxu0 0.0
    %167 = vmatpush2.msra.mxu0 0.0
    %168 = vmatprep.subr.mxu0 0.0
    %169 = vmatpush2.msra.mxu0 0.0
    %170 = vmatprep.subr.mxu0 0.0
    %171 = vmatpush2.msra.mxu0 0.0
    %172 = vmatprep.subr.mxu0 0.0
    %173 = vmatpush2.msra.mxu0 0.0
    %174 = vmatprep.subr.mxu0 0.0
    %175 = vmatpush2.msra.mxu0 0.0
    %176 = vmatprep.subr.mxu0 0.0
    %177 = vmatpush2.msra.mxu0 0.0
    %178 = vmatprep.subr.mxu0 0.0
    %179 = vmatpush2.msra.mxu0 0.0
    %180 = vmatprep.subr.mxu0 0.0
    %181 = vmatpush2.msra.mxu0 0.0
    %182 = vmatprep.subr.mxu0 0.0
    %183 = vmatpush2.msra.mxu0 0.0
    %184 = vmatprep.subr.mxu0 0.0
    %185 = vmatpush2.msra.mxu0 0.0
    %186 = vmatprep.mubr.f32.mxu0 0.0
    %187 = vmatmul.mubr.f32.gmra.mxu0 %v99
    %v188 = vpop.f32.mrf.mxu0
    %v189 = vadd.f32 %v60, %v188
    %v190 = vpop.f32.mrf.mxu0
    %191 = vmatprep.mubr.f32.mxu0 0.0
    %192 = vmatmul.mubr.f32.gmra.mxu0 %v102
    %v193 = vpop.f32.mrf.mxu0
    %v194 = vadd.f32 %v65, %v193
    %v195 = vpop.f32.mrf.mxu0
    %196 = vmatprep.mubr.f32.mxu0 0.0
    %197 = vmatmul.mubr.f32.gmra.mxu0 %v105
    %v198 = vpop.f32.mrf.mxu0
    %v199 = vadd.f32 %v70, %v198
    %v200 = vpop.f32.mrf.mxu0
    %201 = vmatprep.mubr.f32.mxu0 0.0
    %202 = vmatmul.mubr.f32.gmra.mxu0 %v108
    %v203 = vpop.f32.mrf.mxu0
    %v204 = vadd.f32 %v75, %v203
    %v205 = vpop.f32.mrf.mxu0
    %206 = vmatprep.mubr.f32.mxu0 0.0
    %207 = vmatmul.mubr.f32.gmra.mxu0 %v111
    %v208 = vpop.f32.mrf.mxu0
    %v209 = vadd.f32 %v80, %v208
    %v210 = vpop.f32.mrf.mxu0
    %211 = vmatprep.mubr.f32.mxu0 0.0
    %212 = vmatmul.mubr.f32.gmra.mxu0 %v114
    %v213 = vpop.f32.mrf.mxu0
    %v214 = vadd.f32 %v85, %v213
    %v215 = vpop.f32.mrf.mxu0
    %216 = vmatprep.mubr.f32.mxu0 0.0
    %217 = vmatmul.mubr.f32.gmra.mxu0 %v117
    %v218 = vpop.f32.mrf.mxu0
    %v219 = vadd.f32 %v90, %v218
    %v220 = vpop.f32.mrf.mxu0
    %221 = vmatprep.mubr.f32.mxu0 0.0
    %222 = vmatmul.mubr.f32.gmra.mxu0 %v120
    %v223 = vpop.f32.mrf.mxu0
    %v224 = vadd.f32 %v95, %v223
    %v225 = vpop.f32.mrf.mxu0
    %226 = vdwg.mxu0
    %v227 = vld [vmem:[%s3] sm:$0xff]
    %v228 = vld [vmem:[%s3 + $0x8] sm:$0xff]
    %v229 = vld [vmem:[%s3 + $0x10] sm:$0xff]
    %v230 = vld [vmem:[%s3 + $0x18] sm:$0xff]
    %v231 = vld [vmem:[%s3 + $0x20] sm:$0xff]
    %v232 = vld [vmem:[%s3 + $0x28] sm:$0xff]
    %v233 = vld [vmem:[%s3 + $0x30] sm:$0xff]
    %v234 = vld [vmem:[%s3 + $0x38] sm:$0xff]
    %v235 = vld [vmem:[%s4] sm:$0xff]
    %v236 = vld [vmem:[%s4 + $0x8] sm:$0xff]
    %v237 = vld [vmem:[%s4 + $0x10] sm:$0xff]
    %v238 = vld [vmem:[%s4 + $0x18] sm:$0xff]
    %v239 = vld [vmem:[%s4 + $0x20] sm:$0xff]
    %v240 = vld [vmem:[%s4 + $0x28] sm:$0xff]
    %v241 = vld [vmem:[%s4 + $0x30] sm:$0xff]
    %v242 = vld [vmem:[%s4 + $0x38] sm:$0xff]
    %v243 = vadd.f32 %v189, %v194
    %v244 = vadd.f32 %v243, %v199
    %v245 = vadd.f32 %v244, %v204
    %v246 = vadd.f32 %v245, %v209
    %v247 = vadd.f32 %v246, %v214
    %v248 = vadd.f32 %v247, %v219
    %v249 = vadd.f32 %v248, %v224
    %v250 = vrot.slane %v249, 4
    %v251 = vadd.f32 %v249, %v250
    %v252 = vrot.slane %v251, 2
    %v253 = vadd.f32 %v251, %v252
    %v254 = vrot.slane %v253, 1
    %v255 = vadd.f32 %v253, %v254
    %v256 = vrcp.pop 64.0
    %v257 = vmul.f32 %v255, %v256
    %v258 = vsub.f32 %v189, %v257
    %v259 = vsub.f32 %v194, %v257
    %v260 = vsub.f32 %v199, %v257
    %v261 = vsub.f32 %v204, %v257
    %v262 = vsub.f32 %v209, %v257
    %v263 = vsub.f32 %v214, %v257
    %v264 = vsub.f32 %v219, %v257
    %v265 = vsub.f32 %v224, %v257
    %v266 = vmul.f32 %v258, %v258
    %v267 = vmul.f32 %v259, %v259
    %v268 = vmul.f32 %v260, %v260
    %v269 = vmul.f32 %v261, %v261
    %v270 = vmul.f32 %v262, %v262
    %v271 = vmul.f32 %v263, %v263
    %v272 = vmul.f32 %v264, %v264
    %v273 = vmul.f32 %v265, %v265
    %v274 = vadd.f32 %v266, %v267
    %v275 = vadd.f32 %v274, %v268
    %v276 = vadd.f32 %v275, %v269
    %v277 = vadd.f32 %v276, %v270
    %v278 = vadd.f32 %v277, %v271
    %v279 = vadd.f32 %v278, %v272
    %v280 = vadd.f32 %v279, %v273
    %v281 = vrot.slane %v280, 4
    %v282 = vadd.f32 %v280, %v281
    %v283 = vrot.slane %v282, 2
    %v284 = vadd.f32 %v282, %v283
    %v285 = vrot.slane %v284, 1
    %v286 = vadd.f32 %v284, %v285
    %v287 = vmul.f32 %v286, %v256
    %v288 = vadd.f32 %v287, 1e-05
    %v289 = vrsqrt.pop %v288
    %v290 = vmul.f32 %v258, %v289
    %v291 = vmul.f32 %v259, %v289
    %v292 = vmul.f32 %v260, %v289
    %v293 = vmul.f32 %v261, %v289
    %v294 = vmul.f32 %v262, %v289
    %v295 = vmul.f32 %v263, %v289
    %v296 = vmul.f32 %v264, %v289
    %v297 = vmul.f32 %v265, %v289
    %299 = vset.pattern.permute.xlu0 0
    %300 = vperm.xlu0 %299, %v227
    %v301 = vpop.permute.xlu0 %300
    %304 = vset.pattern.permute.xlu0 0
    %305 = vperm.xlu0 %304, %v228
    %v306 = vpop.permute.xlu0 %305
    %309 = vset.pattern.permute.xlu0 0
    %310 = vperm.xlu0 %309, %v229
    %v311 = vpop.permute.xlu0 %310
    %314 = vset.pattern.permute.xlu0 0
    %315 = vperm.xlu0 %314, %v230
    %v316 = vpop.permute.xlu0 %315
    %319 = vset.pattern.permute.xlu0 0
    %320 = vperm.xlu0 %319, %v231
    %v321 = vpop.permute.xlu0 %320
    %324 = vset.pattern.permute.xlu0 0
    %325 = vperm.xlu0 %324, %v232
    %v326 = vpop.permute.xlu0 %325
    %329 = vset.pattern.permute.xlu0 0
    %330 = vperm.xlu0 %329, %v233
    %v331 = vpop.permute.xlu0 %330
    %334 = vset.pattern.permute.xlu0 0
    %335 = vperm.xlu0 %334, %v234
    %v336 = vpop.permute.xlu0 %335
    %v338 = vmul.f32 %v290, %v301
    %v339 = vmul.f32 %v291, %v306
    %v340 = vmul.f32 %v292, %v311
    %v341 = vmul.f32 %v293, %v316
    %v342 = vmul.f32 %v294, %v321
    %v343 = vmul.f32 %v295, %v326
    %v344 = vmul.f32 %v296, %v331
    %v345 = vmul.f32 %v297, %v336
    %347 = vset.pattern.permute.xlu0 0
    %348 = vperm.xlu0 %347, %v235
    %v349 = vpop.permute.xlu0 %348
    %352 = vset.pattern.permute.xlu0 0
    %353 = vperm.xlu0 %352, %v236
    %v354 = vpop.permute.xlu0 %353
    %357 = vset.pattern.permute.xlu0 0
    %358 = vperm.xlu0 %357, %v237
    %v359 = vpop.permute.xlu0 %358
    %362 = vset.pattern.permute.xlu0 0
    %363 = vperm.xlu0 %362, %v238
    %v364 = vpop.permute.xlu0 %363
    %367 = vset.pattern.permute.xlu0 0
    %368 = vperm.xlu0 %367, %v239
    %v369 = vpop.permute.xlu0 %368
    %372 = vset.pattern.permute.xlu0 0
    %373 = vperm.xlu0 %372, %v240
    %v374 = vpop.permute.xlu0 %373
    %377 = vset.pattern.permute.xlu0 0
    %378 = vperm.xlu0 %377, %v241
    %v379 = vpop.permute.xlu0 %378
    %382 = vset.pattern.permute.xlu0 0
    %383 = vperm.xlu0 %382, %v242
    %v384 = vpop.permute.xlu0 %383
    %v386 = vadd.f32 %v338, %v349
    %v387 = vadd.f32 %v339, %v354
    %v388 = vadd.f32 %v340, %v359
    %v389 = vadd.f32 %v341, %v364
    %v390 = vadd.f32 %v342, %v369
    %v391 = vadd.f32 %v343, %v374
    %v392 = vadd.f32 %v344, %v379
    %v393 = vadd.f32 %v345, %v384
    %v394 = vmul.f32 %v386, 0.5
    %v395 = vmul.f32 %v387, 0.5
    %v396 = vmul.f32 %v388, 0.5
    %v397 = vmul.f32 %v389, 0.5
    %v398 = vmul.f32 %v390, 0.5
    %v399 = vmul.f32 %v391, 0.5
    %v400 = vmul.f32 %v392, 0.5
    %v401 = vmul.f32 %v393, 0.5
    %v402 = vrcp.pop 1.4142135
    %v403 = vmul.f32 %v386, %v402
    %v404 = vmul.f32 %v387, %v402
    %v405 = vmul.f32 %v388, %v402
    %v406 = vmul.f32 %v389, %v402
    %v407 = vmul.f32 %v390, %v402
    %v408 = vmul.f32 %v391, %v402
    %v409 = vmul.f32 %v392, %v402
    %v410 = vmul.f32 %v393, %v402
    %v411 = verf.f32.pop %v403
    %v412 = verf.f32.pop %v404
    %v413 = verf.f32.pop %v405
    %v414 = verf.f32.pop %v406
    %v415 = verf.f32.pop %v407
    %v416 = verf.f32.pop %v408
    %v417 = verf.f32.pop %v409
    %v418 = verf.f32.pop %v410
    %v419 = vadd.f32 %v411, 1.0
    %v420 = vadd.f32 %v412, 1.0
    %v421 = vadd.f32 %v413, 1.0
    %v422 = vadd.f32 %v414, 1.0
    %v423 = vadd.f32 %v415, 1.0
    %v424 = vadd.f32 %v416, 1.0
    %v425 = vadd.f32 %v417, 1.0
    %v426 = vadd.f32 %v418, 1.0
    %v427 = vmul.f32 %v394, %v419
    %v428 = vmul.f32 %v395, %v420
    %v429 = vmul.f32 %v396, %v421
    %v430 = vmul.f32 %v397, %v422
    %v431 = vmul.f32 %v398, %v423
    %v432 = vmul.f32 %v399, %v424
    %v433 = vmul.f32 %v400, %v425
    %v434 = vmul.f32 %v401, %v426
    %v435 = vld [vmem:[%s5] sm:$0xff]
    %v436 = vld [vmem:[%s5 + $0x8] sm:$0xff]
    %v437 = vld [vmem:[%s5 + $0x10] sm:$0xff]
    %v438 = vld [vmem:[%s5 + $0x18] sm:$0xff]
    %v439 = vld [vmem:[%s5 + $0x20] sm:$0xff]
    %v440 = vld [vmem:[%s5 + $0x28] sm:$0xff]
    %v441 = vld [vmem:[%s5 + $0x30] sm:$0xff]
    %v442 = vld [vmem:[%s5 + $0x38] sm:$0xff]
    %v443 = vld [vmem:[%s6] sm:$0xff]
    %v444 = vld [vmem:[%s6 + $0x8] sm:$0xff]
    %v445 = vld [vmem:[%s6 + $0x10] sm:$0xff]
    %v446 = vld [vmem:[%s6 + $0x18] sm:$0xff]
    %v447 = vld [vmem:[%s6 + $0x20] sm:$0xff]
    %v448 = vld [vmem:[%s6 + $0x28] sm:$0xff]
    %v449 = vld [vmem:[%s6 + $0x30] sm:$0xff]
    %v450 = vld [vmem:[%s6 + $0x38] sm:$0xff]
    %452 = vset.pattern.permute.xlu0 0
    %453 = vperm.xlu0 %452, %v443
    %v454 = vpop.permute.xlu0 %453
    %457 = vset.pattern.permute.xlu0 0
    %458 = vperm.xlu0 %457, %v444
    %v459 = vpop.permute.xlu0 %458
    %462 = vset.pattern.permute.xlu0 0
    %463 = vperm.xlu0 %462, %v445
    %v464 = vpop.permute.xlu0 %463
    %467 = vset.pattern.permute.xlu0 0
    %468 = vperm.xlu0 %467, %v446
    %v469 = vpop.permute.xlu0 %468
    %472 = vset.pattern.permute.xlu0 0
    %473 = vperm.xlu0 %472, %v447
    %v474 = vpop.permute.xlu0 %473
    %477 = vset.pattern.permute.xlu0 0
    %478 = vperm.xlu0 %477, %v448
    %v479 = vpop.permute.xlu0 %478
    %482 = vset.pattern.permute.xlu0 0
    %483 = vperm.xlu0 %482, %v449
    %v484 = vpop.permute.xlu0 %483
    %487 = vset.pattern.permute.xlu0 0
    %488 = vperm.xlu0 %487, %v450
    %v489 = vpop.permute.xlu0 %488
    %vm491 = vcmask 523264
    %v493 = vsel %vm491, %v435, 0
    %v496 = vsel %vm491, %v436, 0
    %v499 = vsel %vm491, %v437, 0
    %v502 = vsel %vm491, %v438, 0
    %v505 = vsel %vm491, %v439, 0
    %v508 = vsel %vm491, %v440, 0
    %v511 = vsel %vm491, %v441, 0
    %v514 = vsel %vm491, %v442, 0
    %516 = vmatprep.subr.mxu0 0.0
    %517 = vmatpush1.msra.mxu0 0.0
    %518 = vmatprep.subr.mxu0 0.0
    %519 = vmatpush1.msra.mxu0 0.0
    %520 = vmatprep.subr.mxu0 0.0
    %521 = vmatpush1.msra.mxu0 0.0
    %522 = vmatprep.subr.mxu0 0.0
    %523 = vmatpush1.msra.mxu0 0.0
    %524 = vmatprep.subr.mxu0 0.0
    %525 = vmatpush1.msra.mxu0 0.0
    %526 = vmatprep.subr.mxu0 0.0
    %527 = vmatpush1.msra.mxu0 0.0
    %528 = vmatprep.subr.mxu0 0.0
    %529 = vmatpush1.msra.mxu0 0.0
    %530 = vmatprep.subr.mxu0 0.0
    %531 = vmatpush1.msra.mxu0 0.0
    %532 = vmatprep.subr.mxu0 0.0
    %533 = vmatpush1.msra.mxu0 %v434
    %534 = vmatprep.subr.mxu0 0.0
    %535 = vmatpush1.msra.mxu0 %v433
    %536 = vmatprep.subr.mxu0 0.0
    %537 = vmatpush1.msra.mxu0 %v432
    %538 = vmatprep.subr.mxu0 0.0
    %539 = vmatpush1.msra.mxu0 %v431
    %540 = vmatprep.subr.mxu0 0.0
    %541 = vmatpush1.msra.mxu0 %v430
    %542 = vmatprep.subr.mxu0 0.0
    %543 = vmatpush1.msra.mxu0 %v429
    %544 = vmatprep.subr.mxu0 0.0
    %545 = vmatpush1.msra.mxu0 %v428
    %546 = vmatprep.subr.mxu0 0.0
    %547 = vmatpush1.msra.mxu0 %v427
    %548 = vmatprep.subr.mxu0 0.0
    %549 = vmatpush2.msra.mxu0 0.0
    %550 = vmatprep.subr.mxu0 0.0
    %551 = vmatpush2.msra.mxu0 0.0
    %552 = vmatprep.subr.mxu0 0.0
    %553 = vmatpush2.msra.mxu0 0.0
    %554 = vmatprep.subr.mxu0 0.0
    %555 = vmatpush2.msra.mxu0 0.0
    %556 = vmatprep.subr.mxu0 0.0
    %557 = vmatpush2.msra.mxu0 0.0
    %558 = vmatprep.subr.mxu0 0.0
    %559 = vmatpush2.msra.mxu0 0.0
    %560 = vmatprep.subr.mxu0 0.0
    %561 = vmatpush2.msra.mxu0 0.0
    %562 = vmatprep.subr.mxu0 0.0
    %563 = vmatpush2.msra.mxu0 0.0
    %564 = vmatprep.subr.mxu0 0.0
    %565 = vmatpush2.msra.mxu0 0.0
    %566 = vmatprep.subr.mxu0 0.0
    %567 = vmatpush2.msra.mxu0 0.0
    %568 = vmatprep.subr.mxu0 0.0
    %569 = vmatpush2.msra.mxu0 0.0
    %570 = vmatprep.subr.mxu0 0.0
    %571 = vmatpush2.msra.mxu0 0.0
    %572 = vmatprep.subr.mxu0 0.0
    %573 = vmatpush2.msra.mxu0 0.0
    %574 = vmatprep.subr.mxu0 0.0
    %575 = vmatpush2.msra.mxu0 0.0
    %576 = vmatprep.subr.mxu0 0.0
    %577 = vmatpush2.msra.mxu0 0.0
    %578 = vmatprep.subr.mxu0 0.0
    %579 = vmatpush2.msra.mxu0 0.0
    %580 = vmatprep.mubr.f32.mxu0 0.0
    %581 = vmatmul.mubr.f32.gmra.mxu0 %v493
    %v582 = vpop.f32.mrf.mxu0
    %v583 = vadd.f32 %v454, %v582
    %v584 = vpop.f32.mrf.mxu0
    %585 = vmatprep.mubr.f32.mxu0 0.0
    %586 = vmatmul.mubr.f32.gmra.mxu0 %v496
    %v587 = vpop.f32.mrf.mxu0
    %v588 = vadd.f32 %v459, %v587
    %v589 = vpop.f32.mrf.mxu0
    %590 = vmatprep.mubr.f32.mxu0 0.0
    %591 = vmatmul.mubr.f32.gmra.mxu0 %v499
    %v592 = vpop.f32.mrf.mxu0
    %v593 = vadd.f32 %v464, %v592
    %v594 = vpop.f32.mrf.mxu0
    %595 = vmatprep.mubr.f32.mxu0 0.0
    %596 = vmatmul.mubr.f32.gmra.mxu0 %v502
    %v597 = vpop.f32.mrf.mxu0
    %v598 = vadd.f32 %v469, %v597
    %v599 = vpop.f32.mrf.mxu0
    %600 = vmatprep.mubr.f32.mxu0 0.0
    %601 = vmatmul.mubr.f32.gmra.mxu0 %v505
    %v602 = vpop.f32.mrf.mxu0
    %v603 = vadd.f32 %v474, %v602
    %v604 = vpop.f32.mrf.mxu0
    %605 = vmatprep.mubr.f32.mxu0 0.0
    %606 = vmatmul.mubr.f32.gmra.mxu0 %v508
    %v607 = vpop.f32.mrf.mxu0
    %v608 = vadd.f32 %v479, %v607
    %v609 = vpop.f32.mrf.mxu0
    %610 = vmatprep.mubr.f32.mxu0 0.0
    %611 = vmatmul.mubr.f32.gmra.mxu0 %v511
    %v612 = vpop.f32.mrf.mxu0
    %v613 = vadd.f32 %v484, %v612
    %v614 = vpop.f32.mrf.mxu0
    %615 = vmatprep.mubr.f32.mxu0 0.0
    %616 = vmatmul.mubr.f32.gmra.mxu0 %v514
    %v617 = vpop.f32.mrf.mxu0
    %v618 = vadd.f32 %v489, %v617
    %v619 = vpop.f32.mrf.mxu0
    %620 = vdwg.mxu0
    %v621 = vld [vmem:[%s7] sm:$0xff]
    %v622 = vld [vmem:[%s7 + $0x8] sm:$0xff]
    %v623 = vld [vmem:[%s7 + $0x10] sm:$0xff]
    %v624 = vld [vmem:[%s7 + $0x18] sm:$0xff]
    %v625 = vld [vmem:[%s7 + $0x20] sm:$0xff]
    %v626 = vld [vmem:[%s7 + $0x28] sm:$0xff]
    %v627 = vld [vmem:[%s7 + $0x30] sm:$0xff]
    %v628 = vld [vmem:[%s7 + $0x38] sm:$0xff]
    %v629 = vld [vmem:[%s8] sm:$0xff]
    %v630 = vld [vmem:[%s8 + $0x8] sm:$0xff]
    %v631 = vld [vmem:[%s8 + $0x10] sm:$0xff]
    %v632 = vld [vmem:[%s8 + $0x18] sm:$0xff]
    %v633 = vld [vmem:[%s8 + $0x20] sm:$0xff]
    %v634 = vld [vmem:[%s8 + $0x28] sm:$0xff]
    %v635 = vld [vmem:[%s8 + $0x30] sm:$0xff]
    %v636 = vld [vmem:[%s8 + $0x38] sm:$0xff]
    %v637 = vadd.f32 %v583, %v588
    %v638 = vadd.f32 %v637, %v593
    %v639 = vadd.f32 %v638, %v598
    %v640 = vadd.f32 %v639, %v603
    %v641 = vadd.f32 %v640, %v608
    %v642 = vadd.f32 %v641, %v613
    %v643 = vadd.f32 %v642, %v618
    %v644 = vrot.slane %v643, 4
    %v645 = vadd.f32 %v643, %v644
    %v646 = vrot.slane %v645, 2
    %v647 = vadd.f32 %v645, %v646
    %v648 = vrot.slane %v647, 1
    %v649 = vadd.f32 %v647, %v648
    %v650 = vmul.f32 %v649, %v256
    %v651 = vsub.f32 %v583, %v650
    %v652 = vsub.f32 %v588, %v650
    %v653 = vsub.f32 %v593, %v650
    %v654 = vsub.f32 %v598, %v650
    %v655 = vsub.f32 %v603, %v650
    %v656 = vsub.f32 %v608, %v650
    %v657 = vsub.f32 %v613, %v650
    %v658 = vsub.f32 %v618, %v650
    %v659 = vmul.f32 %v651, %v651
    %v660 = vmul.f32 %v652, %v652
    %v661 = vmul.f32 %v653, %v653
    %v662 = vmul.f32 %v654, %v654
    %v663 = vmul.f32 %v655, %v655
    %v664 = vmul.f32 %v656, %v656
    %v665 = vmul.f32 %v657, %v657
    %v666 = vmul.f32 %v658, %v658
    %v667 = vadd.f32 %v659, %v660
    %v668 = vadd.f32 %v667, %v661
    %v669 = vadd.f32 %v668, %v662
    %v670 = vadd.f32 %v669, %v663
    %v671 = vadd.f32 %v670, %v664
    %v672 = vadd.f32 %v671, %v665
    %v673 = vadd.f32 %v672, %v666
    %v674 = vrot.slane %v673, 4
    %v675 = vadd.f32 %v673, %v674
    %v676 = vrot.slane %v675, 2
    %v677 = vadd.f32 %v675, %v676
    %v678 = vrot.slane %v677, 1
    %v679 = vadd.f32 %v677, %v678
    %v680 = vmul.f32 %v679, %v256
    %v681 = vadd.f32 %v680, 1e-05
    %v682 = vrsqrt.pop %v681
    %v683 = vmul.f32 %v651, %v682
    %v684 = vmul.f32 %v652, %v682
    %v685 = vmul.f32 %v653, %v682
    %v686 = vmul.f32 %v654, %v682
    %v687 = vmul.f32 %v655, %v682
    %v688 = vmul.f32 %v656, %v682
    %v689 = vmul.f32 %v657, %v682
    %v690 = vmul.f32 %v658, %v682
    %692 = vset.pattern.permute.xlu0 0
    %693 = vperm.xlu0 %692, %v621
    %v694 = vpop.permute.xlu0 %693
    %697 = vset.pattern.permute.xlu0 0
    %698 = vperm.xlu0 %697, %v622
    %v699 = vpop.permute.xlu0 %698
    %702 = vset.pattern.permute.xlu0 0
    %703 = vperm.xlu0 %702, %v623
    %v704 = vpop.permute.xlu0 %703
    %707 = vset.pattern.permute.xlu0 0
    %708 = vperm.xlu0 %707, %v624
    %v709 = vpop.permute.xlu0 %708
    %712 = vset.pattern.permute.xlu0 0
    %713 = vperm.xlu0 %712, %v625
    %v714 = vpop.permute.xlu0 %713
    %717 = vset.pattern.permute.xlu0 0
    %718 = vperm.xlu0 %717, %v626
    %v719 = vpop.permute.xlu0 %718
    %722 = vset.pattern.permute.xlu0 0
    %723 = vperm.xlu0 %722, %v627
    %v724 = vpop.permute.xlu0 %723
    %727 = vset.pattern.permute.xlu0 0
    %728 = vperm.xlu0 %727, %v628
    %v729 = vpop.permute.xlu0 %728
    %v731 = vmul.f32 %v683, %v694
    %v732 = vmul.f32 %v684, %v699
    %v733 = vmul.f32 %v685, %v704
    %v734 = vmul.f32 %v686, %v709
    %v735 = vmul.f32 %v687, %v714
    %v736 = vmul.f32 %v688, %v719
    %v737 = vmul.f32 %v689, %v724
    %v738 = vmul.f32 %v690, %v729
    %740 = vset.pattern.permute.xlu0 0
    %741 = vperm.xlu0 %740, %v629
    %v742 = vpop.permute.xlu0 %741
    %745 = vset.pattern.permute.xlu0 0
    %746 = vperm.xlu0 %745, %v630
    %v747 = vpop.permute.xlu0 %746
    %750 = vset.pattern.permute.xlu0 0
    %751 = vperm.xlu0 %750, %v631
    %v752 = vpop.permute.xlu0 %751
    %755 = vset.pattern.permute.xlu0 0
    %756 = vperm.xlu0 %755, %v632
    %v757 = vpop.permute.xlu0 %756
    %760 = vset.pattern.permute.xlu0 0
    %761 = vperm.xlu0 %760, %v633
    %v762 = vpop.permute.xlu0 %761
    %765 = vset.pattern.permute.xlu0 0
    %766 = vperm.xlu0 %765, %v634
    %v767 = vpop.permute.xlu0 %766
    %770 = vset.pattern.permute.xlu0 0
    %771 = vperm.xlu0 %770, %v635
    %v772 = vpop.permute.xlu0 %771
    %775 = vset.pattern.permute.xlu0 0
    %776 = vperm.xlu0 %775, %v636
    %v777 = vpop.permute.xlu0 %776
    %v779 = vadd.f32 %v731, %v742
    %v780 = vadd.f32 %v732, %v747
    %v781 = vadd.f32 %v733, %v752
    %v782 = vadd.f32 %v734, %v757
    %v783 = vadd.f32 %v735, %v762
    %v784 = vadd.f32 %v736, %v767
    %v785 = vadd.f32 %v737, %v772
    %v786 = vadd.f32 %v738, %v777
    %v787 = vmul.f32 %v779, 0.5
    %v788 = vmul.f32 %v780, 0.5
    %v789 = vmul.f32 %v781, 0.5
    %v790 = vmul.f32 %v782, 0.5
    %v791 = vmul.f32 %v783, 0.5
    %v792 = vmul.f32 %v784, 0.5
    %v793 = vmul.f32 %v785, 0.5
    %v794 = vmul.f32 %v786, 0.5
    %v795 = vmul.f32 %v779, %v402
    %v796 = vmul.f32 %v780, %v402
    %v797 = vmul.f32 %v781, %v402
    %v798 = vmul.f32 %v782, %v402
    %v799 = vmul.f32 %v783, %v402
    %v800 = vmul.f32 %v784, %v402
    %v801 = vmul.f32 %v785, %v402
    %v802 = vmul.f32 %v786, %v402
    %v803 = verf.f32.pop %v795
    %v804 = verf.f32.pop %v796
    %v805 = verf.f32.pop %v797
    %v806 = verf.f32.pop %v798
    %v807 = verf.f32.pop %v799
    %v808 = verf.f32.pop %v800
    %v809 = verf.f32.pop %v801
    %v810 = verf.f32.pop %v802
    %v811 = vadd.f32 %v803, 1.0
    %v812 = vadd.f32 %v804, 1.0
    %v813 = vadd.f32 %v805, 1.0
    %v814 = vadd.f32 %v806, 1.0
    %v815 = vadd.f32 %v807, 1.0
    %v816 = vadd.f32 %v808, 1.0
    %v817 = vadd.f32 %v809, 1.0
    %v818 = vadd.f32 %v810, 1.0
    %v819 = vmul.f32 %v787, %v811
    %v820 = vmul.f32 %v788, %v812
    %v821 = vmul.f32 %v789, %v813
    %v822 = vmul.f32 %v790, %v814
    %v823 = vmul.f32 %v791, %v815
    %v824 = vmul.f32 %v792, %v816
    %v825 = vmul.f32 %v793, %v817
    %v826 = vmul.f32 %v794, %v818
    %v827 = vld [vmem:[%s9] sm:$0xff]
    %v828 = vld [vmem:[%s10] sm:$0xff]
    %830 = vset.pattern.permute.xlu0 0
    %831 = vperm.xlu0 %830, %v828
    %v832 = vpop.permute.xlu0 %831
    %v835 = vsel %vm491, %v827, 0
    %837 = vmatprep.subr.mxu0 0.0
    %838 = vmatpush1.msra.mxu0 0.0
    %839 = vmatprep.subr.mxu0 0.0
    %840 = vmatpush1.msra.mxu0 0.0
    %841 = vmatprep.subr.mxu0 0.0
    %842 = vmatpush1.msra.mxu0 0.0
    %843 = vmatprep.subr.mxu0 0.0
    %844 = vmatpush1.msra.mxu0 0.0
    %845 = vmatprep.subr.mxu0 0.0
    %846 = vmatpush1.msra.mxu0 0.0
    %847 = vmatprep.subr.mxu0 0.0
    %848 = vmatpush1.msra.mxu0 0.0
    %849 = vmatprep.subr.mxu0 0.0
    %850 = vmatpush1.msra.mxu0 0.0
    %851 = vmatprep.subr.mxu0 0.0
    %852 = vmatpush1.msra.mxu0 0.0
    %853 = vmatprep.subr.mxu0 0.0
    %854 = vmatpush1.msra.mxu0 %v826
    %855 = vmatprep.subr.mxu0 0.0
    %856 = vmatpush1.msra.mxu0 %v825
    %857 = vmatprep.subr.mxu0 0.0
    %858 = vmatpush1.msra.mxu0 %v824
    %859 = vmatprep.subr.mxu0 0.0
    %860 = vmatpush1.msra.mxu0 %v823
    %861 = vmatprep.subr.mxu0 0.0
    %862 = vmatpush1.msra.mxu0 %v822
    %863 = vmatprep.subr.mxu0 0.0
    %864 = vmatpush1.msra.mxu0 %v821
    %865 = vmatprep.subr.mxu0 0.0
    %866 = vmatpush1.msra.mxu0 %v820
    %867 = vmatprep.subr.mxu0 0.0
    %868 = vmatpush1.msra.mxu0 %v819
    %869 = vmatprep.subr.mxu0 0.0
    %870 = vmatpush2.msra.mxu0 0.0
    %871 = vmatprep.subr.mxu0 0.0
    %872 = vmatpush2.msra.mxu0 0.0
    %873 = vmatprep.subr.mxu0 0.0
    %874 = vmatpush2.msra.mxu0 0.0
    %875 = vmatprep.subr.mxu0 0.0
    %876 = vmatpush2.msra.mxu0 0.0
    %877 = vmatprep.subr.mxu0 0.0
    %878 = vmatpush2.msra.mxu0 0.0
    %879 = vmatprep.subr.mxu0 0.0
    %880 = vmatpush2.msra.mxu0 0.0
    %881 = vmatprep.subr.mxu0 0.0
    %882 = vmatpush2.msra.mxu0 0.0
    %883 = vmatprep.subr.mxu0 0.0
    %884 = vmatpush2.msra.mxu0 0.0
    %885 = vmatprep.subr.mxu0 0.0
    %886 = vmatpush2.msra.mxu0 0.0
    %887 = vmatprep.subr.mxu0 0.0
    %888 = vmatpush2.msra.mxu0 0.0
    %889 = vmatprep.subr.mxu0 0.0
    %890 = vmatpush2.msra.mxu0 0.0
    %891 = vmatprep.subr.mxu0 0.0
    %892 = vmatpush2.msra.mxu0 0.0
    %893 = vmatprep.subr.mxu0 0.0
    %894 = vmatpush2.msra.mxu0 0.0
    %895 = vmatprep.subr.mxu0 0.0
    %896 = vmatpush2.msra.mxu0 0.0
    %897 = vmatprep.subr.mxu0 0.0
    %898 = vmatpush2.msra.mxu0 0.0
    %899 = vmatprep.subr.mxu0 0.0
    %900 = vmatpush2.msra.mxu0 0.0
    %901 = vmatprep.mubr.f32.mxu0 0.0
    %902 = vmatmul.mubr.f32.gmra.mxu0 %v835
    %v903 = vpop.f32.mrf.mxu0
    %v904 = vadd.f32 %v832, %v903
    %v905 = vpop.f32.mrf.mxu0
    %906 = vdwg.mxu0
    %907 = vst [vmem:[#allocation2] sm:$0xff] %v904
    // Predicated region
    $region46: #{tpu_custom_call.1} parent=1 // pred_check
      _
    $region47: #{tpu_custom_call.1} parent=1 // pred_check_branch
      %909 = sbr.rel (0) target = $region49
    $region48: #{tpu_custom_call.1} parent=1 // pred_region
      %s911 = ssub.s32 128, 128
      %912 = vsyncadd [#allocation3], %s911
      %s914 = sshll.u32 [#allocation2], 4
      %s915 = int_to_ptr.vmem [resolvable:$true] %s914
      %917 = dma.vmem_to_hbm [thread:$0]  %s915, 128, %s11, [#allocation3]
    $region49: #{tpu_custom_call.1} parent=1 // pred_fallthru
      _
    // Predicated region
    $region50: #{tpu_custom_call.1} parent=1 // pred_check
      _
    $region51: #{tpu_custom_call.1} parent=1 // pred_check_branch
      %919 = sbr.rel (0) target = $region53
    $region52: #{tpu_custom_call.1} parent=1 // pred_region
      %920 = dma.done [#allocation3], 128
    $region53: #{tpu_custom_call.1} parent=1 // pred_fallthru
      _
    %921 = vsyncpa [#allocation3], 1

</llo_original>
